<compile_context>
chip_gen: v6e
topology: v6e:2x2x1
jax: 0.10.0
libtpu: 0.0.40
codegen_flags: <defaults>
</compile_context>

<pallas_src>
import jax
import jax.numpy as jnp
import numpy as np
from jax import lax
from jax.experimental import pallas as pl
from jax.experimental.pallas import tpu as pltpu

EPS = 1e-5
# bf16 MXU fast path on v5e/v6e/v7x (f32 accumulate).  Use jnp.float32 to get
# 1e-4 agreement with the f32 reference back.
MATMUL_DTYPE = jnp.bfloat16


def padding_same(input_size, kernel, stride=1, dilation=1):
    """Same formula as the PyTorch helper (minus the print)."""
    return int(0.5 * (stride * (input_size - 1) - input_size + kernel
                      + (dilation - 1) * (kernel - 1)))


def _round_up(x, m):
    return (x + m - 1) // m * m


def _make_dense_block_kernel(*, NL, LANES, K, dil, pad,
                             c0p, c_out_p, c_mid_p, n_blocks):
    inv_nl = 1.0 / float(NL)

    def bn_relu(h, g, b, lane_mask):
        # Training-mode BatchNorm1d: biased batch stats over the N*L lanes.
        # Invariant: h[:, NL:] == 0, so the plain lane sum is already masked.
        mu = jnp.sum(h, axis=1, keepdims=True) * inv_nl
        d = h - mu
        dm = d * lane_mask
        var = jnp.sum(dm * dm, axis=1, keepdims=True) * inv_nl
        out = jnp.maximum(d * lax.rsqrt(var + EPS) * g + b, 0.0)
        return out * lane_mask                 # keep padded lanes exactly zero

    def kernel(x_ref, mask_ref, bn_ref, wpre_ref, wconv_ref, o_ref):
        # Hoisted masks (step-invariant; avoid re-loading per step).
        lane_mask = mask_ref[0:1, :]                              # (1, LANES)
        tap_masks = [mask_ref[t + 1:t + 2, :] for t in range(K)]  # halo masks

        # Seed the dense concat: o_ref doubles as the growing feature buffer
        # (equivalent of torch.cat(prev_features, 1)), 8-aligned slots.
        o_ref[0:c0p, :] = x_ref[...]

        for i in range(n_blocks):
            cinp = c0p + i * c_out_p            # padded c_in of step i
            g0 = bn_ref[0:cinp,    4 * i + 0:4 * i + 1]
            b0 = bn_ref[0:cinp,    4 * i + 1:4 * i + 2]
            g1 = bn_ref[0:c_mid_p, 4 * i + 2:4 * i + 3]
            b1 = bn_ref[0:c_mid_p, 4 * i + 3:4 * i + 4]
            wpre = wpre_ref[i * c_mid_p:(i + 1) * c_mid_p, 0:cinp]
            wconv = wconv_ref[i * c_out_p:(i + 1) * c_out_p, :]

            # ---- DenseBlock bns[i] -> ReLU ---------------------------------
            h = bn_relu(o_ref[0:cinp, :], g0, b0, lane_mask)      # (cinp, LANES)

            # ---- 1x1 pre-conv: ONE (c_mid, cin) @ (cin, LANES) MXU push ----
            m = jnp.dot(wpre, h.astype(MATMUL_DTYPE),
                        preferred_element_type=jnp.float32)       # (c_mid_p, LANES)

            # ---- pre-conv BatchNorm1d -> ReLU ------------------------------
            m = bn_relu(m, g1, b1, lane_mask)

            # ---- dilated 'same' Conv1d: K shifted taps stacked along the
            #      sublane (contraction) axis -> ONE MXU push -----------------
            taps = []
            for t in range(K):
                s = t * dil - pad                                  # static shift
                r = m if s == 0 else pltpu.roll(m, shift=(-s) % LANES, axis=1)
                taps.append((r * tap_masks[t]).astype(MATMUL_DTYPE))
            stacked = taps[0] if K == 1 else jnp.concatenate(taps, axis=0)
            y = jnp.dot(wconv, stacked,
                        preferred_element_type=jnp.float32)       # (c_out_p, LANES)

            # ---- dense concat: append at an 8-aligned sublane offset --------
            off = c0p + i * c_out_p
            o_ref[off:off + c_out_p, :] = y

    return kernel


def dense_block_forward(x, params, *, K, dil, L_in):
    """Fused forward of the whole DenseBlock (all steps + dense concat)."""
    N, C0, L = x.shape
    pad = padding_same(L_in, K, 1, dil)
    L_out = L + 2 * pad - dil * (K - 1)                            # stride == 1
    assert L_out == L, (
        f"'same' conv changes length ({L} -> {L_out}); dense concat would "
        f"fail (dil*(K-1) must be even)")

    n_blocks = len(params)
    c_mid = params[0]['w_pre'].shape[0]
    c_out = params[0]['w_conv'].shape[0]
    for i, p in enumerate(params):
        assert p['w_pre'].shape == (c_mid, C0 + i * c_out), p['w_pre'].shape
        assert p['w_conv'].shape == (c_out, c_mid, K), p['w_conv'].shape

    # 8-sublane-aligned channel slots; lane axis padded to a multiple of 128.
    c0p = _round_up(C0, 8)
    c_out_p = _round_up(c_out, 8)
    c_mid_p = _round_up(c_mid, 8)
    NL = N * L
    LANES = _round_up(NL, 128)
    C_in_pad_max = c0p + (n_blocks - 1) * c_out_p
    C_pad = c0p + n_blocks * c_out_p
    BN_ROWS = max(C_in_pad_max, c_mid_p)
    f32 = jnp.float32

    def segments(step):
        # (orig_start, padded_start, length) of real channels seen by `step`.
        segs = [(0, 0, C0)]
        for j in range(step):
            segs.append((C0 + j * c_out, c0p + j * c_out_p, c_out))
        return segs

    # ---- pack all per-step parameters into a few slab inputs (5 DMAs) ------
    bn_pack = jnp.zeros((BN_ROWS, 4 * n_blocks), f32)
    wpre_all = jnp.zeros((n_blocks * c_mid_p, C_in_pad_max), f32)
    wconv_all = jnp.zeros((n_blocks * c_out_p, K * c_mid_p), f32)
    for i, p in enumerate(params):
        for (os, ps, ln) in segments(i):
            bn_pack = bn_pack.at[ps:ps + ln, 4 * i + 0].set(
                p['g0'][os:os + ln].astype(f32))
            bn_pack = bn_pack.at[ps:ps + ln, 4 * i + 1].set(
                p['b0'][os:os + ln].astype(f32))
            wpre_all = wpre_all.at[i * c_mid_p:i * c_mid_p + c_mid,
                                   ps:ps + ln].set(
                p['w_pre'][:, os:os + ln].astype(f32))
        bn_pack = bn_pack.at[0:c_mid, 4 * i + 2].set(p['g1'].astype(f32))
        bn_pack = bn_pack.at[0:c_mid, 4 * i + 3].set(p['b1'].astype(f32))
        for t in range(K):
            wconv_all = wconv_all.at[i * c_out_p:i * c_out_p + c_out,
                                     t * c_mid_p:t * c_mid_p + c_mid].set(
                p['w_conv'][:, :, t].astype(f32))
    wpre_all = wpre_all.astype(MATMUL_DTYPE)
    wconv_all = wconv_all.astype(MATMUL_DTYPE)

    # ---- static lane-validity + per-tap halo masks (built host-side) -------
    lane = np.arange(LANES)
    l_loc = lane % L
    masks = np.zeros((K + 1, LANES), np.float32)
    masks[0] = (lane < NL).astype(np.float32)
    for t in range(K):
        s = t * dil - pad
        masks[t + 1] = ((lane < NL) & (l_loc + s >= 0)
                        & (l_loc + s < L)).astype(np.float32)
    masks = jnp.asarray(masks)

    # ---- lane-dense, 8-aligned activation layout: (channels, N*L padded) ---
    x2 = jnp.transpose(x, (1, 0, 2)).reshape(C0, NL).astype(f32)
    x2p = jnp.zeros((c0p, LANES), f32).at[0:C0, 0:NL].set(x2)

    kernel = _make_dense_block_kernel(
        NL=NL, LANES=LANES, K=K, dil=dil, pad=pad,
        c0p=c0p, c_out_p=c_out_p, c_mid_p=c_mid_p, n_blocks=n_blocks)

    vmem = pl.BlockSpec(memory_space=pltpu.MemorySpace.VMEM)
    out_p = pl.pallas_call(
        kernel,
        out_shape=jax.ShapeDtypeStruct((C_pad, LANES), f32),
        in_specs=[vmem] * 5,
        out_specs=vmem,
    )(x2p, masks, bn_pack, wpre_all, wconv_all)

    # ---- strip channel / lane padding, back to PyTorch's (N, C, L) ---------
    parts = [out_p[0:C0, 0:NL]]
    for i in range(n_blocks):
        off = c0p + i * c_out_p
        parts.append(out_p[off:off + c_out, 0:NL])
    out2 = jnp.concatenate(parts, axis=0)
    C_final = C0 + n_blocks * c_out
    return jnp.transpose(out2.reshape(C_final, N, L), (1, 0, 2)).astype(x.dtype)


# ----------------------------- pure-JAX reference ---------------------------
def _bn_relu_ref(x, g, b):
    mu = jnp.mean(x, axis=(0, 2), keepdims=True)
    var = jnp.mean((x - mu) ** 2, axis=(0, 2), keepdims=True)
    h = (x - mu) * lax.rsqrt(var + EPS) * g.reshape(1, -1, 1) + b.reshape(1, -1, 1)
    return jax.nn.relu(h)


def dense_block_reference(x, params, *, K, dil, L_in):
    pad = padding_same(L_in, K, 1, dil)
    out = x
    prev = [x]
    for p in params:
        h = _bn_relu_ref(out, p['g0'], p['b0'])
        h = jnp.einsum('oc,ncl->nol', p['w_pre'], h)
        h = _bn_relu_ref(h, p['g1'], p['b1'])
        h = lax.conv_general_dilated(
            h, p['w_conv'], window_strides=(1,), padding=[(pad, pad)],
            rhs_dilation=(dil,), dimension_numbers=('NCH', 'OIH', 'NCH'))
        prev.append(h)
        out = jnp.concatenate(prev, axis=1)
    return out


if __name__ == "__main__":
    # DenseBlock hyperparameters (len(kernels)==len(layer_dilations)==1 is
    # required for the PyTorch forward's channel bookkeeping to be consistent).
    N, C0, L = 2, 4, 16
    kernels = [3]
    layer_dilations = [2]
    channel_per_kernel = 8
    n_blocks = 2
    n_growth_rate = 4
    C_mid = n_growth_rate * channel_per_kernel

    key = jax.random.PRNGKey(0)
    keys = jax.random.split(key, 1 + 6 * n_blocks)
    x = jax.random.normal(keys[0], (N, C0, L), jnp.float32)

    params = []
    in_ch = C0
    k = 1
    for _ in range(n_blocks):
        params.append(dict(
            g0=1.0 + 0.1 * jax.random.normal(keys[k + 0], (in_ch,), jnp.float32),
            b0=0.1 * jax.random.normal(keys[k + 1], (in_ch,), jnp.float32),
            w_pre=0.2 * jax.random.normal(keys[k + 2], (C_mid, in_ch), jnp.float32),
            g1=1.0 + 0.1 * jax.random.normal(keys[k + 3], (C_mid,), jnp.float32),
            b1=0.1 * jax.random.normal(keys[k + 4], (C_mid,), jnp.float32),
            w_conv=0.2 * jax.random.normal(
                keys[k + 5], (channel_per_kernel, C_mid, kernels[0]), jnp.float32),
        ))
        k += 6
        in_ch += len(kernels) * len(layer_dilations) * channel_per_kernel

    out = dense_block_forward(x, params, K=kernels[0],
                              dil=layer_dilations[0], L_in=L)
    out = jax.block_until_ready(out)

    ref = dense_block_reference(x, params, K=kernels[0],
                                dil=layer_dilations[0], L_in=L)
    # bf16 MXU operands (f32 accumulate) need a looser tolerance than the pure
    # f32 path (per performance-review correctness note).
    tol = 1e-4 if MATMUL_DTYPE == jnp.float32 else 5e-2
    np.testing.assert_allclose(np.asarray(out), np.asarray(ref),
                               rtol=tol, atol=tol)
    assert out.shape == (N, C0 + n_blocks * channel_per_kernel, L), out.shape
    print("KERNEL_OK")
</pallas_src>

<mosaic_0001>
module attributes {stable_mosaic.version = 11 : i64} {
  func.func @kernel(%arg0: memref<8x128xf32, #tpu.memory_space<vmem>>, %arg1: memref<4x128xf32, #tpu.memory_space<vmem>>, %arg2: memref<32x8xf32, #tpu.memory_space<vmem>>, %arg3: memref<64x16xbf16, #tpu.memory_space<vmem>>, %arg4: memref<16x96xbf16, #tpu.memory_space<vmem>>, %arg5: memref<24x128xf32, #tpu.memory_space<vmem>>) attributes {dimension_semantics = [], scalar_prefetch = 0 : i64, scratch_operands = 0 : i64, tpu.core_type = #tpu.core_type<tc>} {
    %c0 = arith.constant 0 : index
    %c0_0 = arith.constant 0 : index
    %0 = vector.load %arg1[%c0, %c0_0] : memref<4x128xf32, #tpu.memory_space<vmem>>, vector<1x128xf32>
    %c1 = arith.constant 1 : index
    %c0_1 = arith.constant 0 : index
    %1 = vector.load %arg1[%c1, %c0_1] : memref<4x128xf32, #tpu.memory_space<vmem>>, vector<1x128xf32>
    %c2 = arith.constant 2 : index
    %c0_2 = arith.constant 0 : index
    %2 = vector.load %arg1[%c2, %c0_2] : memref<4x128xf32, #tpu.memory_space<vmem>>, vector<1x128xf32>
    %c3 = arith.constant 3 : index
    %c0_3 = arith.constant 0 : index
    %3 = vector.load %arg1[%c3, %c0_3] : memref<4x128xf32, #tpu.memory_space<vmem>>, vector<1x128xf32>
    %c0_4 = arith.constant 0 : index
    %c0_5 = arith.constant 0 : index
    %4 = vector.load %arg0[%c0_4, %c0_5] : memref<8x128xf32, #tpu.memory_space<vmem>>, vector<8x128xf32>
    %c0_6 = arith.constant 0 : index
    %c0_7 = arith.constant 0 : index
    %5 = vector.load %arg5[%c0_6, %c0_7] : memref<24x128xf32, #tpu.memory_space<vmem>>, vector<8x128xf32>
    tpu.vector_store %arg5[%c0_6, %c0_7], %4 {strides = array<i32>} : memref<24x128xf32, #tpu.memory_space<vmem>>, vector<8x128xf32>,
    %c0_8 = arith.constant 0 : index
    %c0_9 = arith.constant 0 : index
    %6 = vector.load %arg2[%c0_8, %c0_9] : memref<32x8xf32, #tpu.memory_space<vmem>>, vector<8x1xf32>
    %c0_10 = arith.constant 0 : index
    %c1_11 = arith.constant 1 : index
    %7 = vector.load %arg2[%c0_10, %c1_11] : memref<32x8xf32, #tpu.memory_space<vmem>>, vector<8x1xf32>
    %c0_12 = arith.constant 0 : index
    %c2_13 = arith.constant 2 : index
    %8 = vector.load %arg2[%c0_12, %c2_13] : memref<32x8xf32, #tpu.memory_space<vmem>>, vector<32x1xf32>
    %c0_14 = arith.constant 0 : index
    %c3_15 = arith.constant 3 : index
    %9 = vector.load %arg2[%c0_14, %c3_15] : memref<32x8xf32, #tpu.memory_space<vmem>>, vector<32x1xf32>
    %c0_16 = arith.constant 0 : index
    %c0_17 = arith.constant 0 : index
    %10 = vector.load %arg3[%c0_16, %c0_17] : memref<64x16xbf16, #tpu.memory_space<vmem>>, vector<32x8xbf16>
    %c0_18 = arith.constant 0 : index
    %c0_19 = arith.constant 0 : index
    %11 = vector.load %arg4[%c0_18, %c0_19] : memref<16x96xbf16, #tpu.memory_space<vmem>>, vector<8x96xbf16>
    %c0_20 = arith.constant 0 : index
    %c0_21 = arith.constant 0 : index
    %12 = vector.load %arg5[%c0_20, %c0_21] : memref<24x128xf32, #tpu.memory_space<vmem>>, vector<8x128xf32>
    %cst = arith.constant dense<0.000000e+00> : vector<8xf32>
    %13 = vector.multi_reduction <add>, %12, %cst [1] : vector<8x128xf32> to vector<8xf32>
    %14 = vector.shape_cast %13 : vector<8xf32> to vector<8x1xf32>
    %cst_22 = arith.constant 3.125000e-02 : f32
    %15 = vector.broadcast %cst_22 : f32 to vector<8x1xf32>
    %16 = arith.mulf %14, %15 : vector<8x1xf32>
    %17 = vector.broadcast %16 : vector<8x1xf32> to vector<8x128xf32>
    %18 = arith.subf %12, %17 : vector<8x128xf32>
    %19 = vector.broadcast %0 : vector<1x128xf32> to vector<8x128xf32>
    %20 = arith.mulf %18, %19 : vector<8x128xf32>
    %21 = arith.mulf %20, %20 : vector<8x128xf32>
    %cst_23 = arith.constant dense<0.000000e+00> : vector<8xf32>
    %22 = vector.multi_reduction <add>, %21, %cst_23 [1] : vector<8x128xf32> to vector<8xf32>
    %23 = vector.shape_cast %22 : vector<8xf32> to vector<8x1xf32>
    %cst_24 = arith.constant 3.125000e-02 : f32
    %24 = vector.broadcast %cst_24 : f32 to vector<8x1xf32>
    %25 = arith.mulf %23, %24 : vector<8x1xf32>
    %cst_25 = arith.constant 9.99999974E-6 : f32
    %26 = vector.broadcast %cst_25 : f32 to vector<8x1xf32>
    %27 = arith.addf %25, %26 : vector<8x1xf32>
    %28 = math.rsqrt %27 : vector<8x1xf32>
    %29 = vector.broadcast %28 : vector<8x1xf32> to vector<8x128xf32>
    %30 = arith.mulf %18, %29 : vector<8x128xf32>
    %31 = vector.broadcast %6 : vector<8x1xf32> to vector<8x128xf32>
    %32 = arith.mulf %30, %31 : vector<8x128xf32>
    %33 = vector.broadcast %7 : vector<8x1xf32> to vector<8x128xf32>
    %34 = arith.addf %32, %33 : vector<8x128xf32>
    %cst_26 = arith.constant 0.000000e+00 : f32
    %35 = vector.broadcast %cst_26 : f32 to vector<8x128xf32>
    %36 = arith.maximumf %34, %35 : vector<8x128xf32>
    %37 = vector.broadcast %0 : vector<1x128xf32> to vector<8x128xf32>
    %38 = arith.mulf %36, %37 : vector<8x128xf32>
    %39 = arith.truncf %38 : vector<8x128xf32> to vector<8x128xbf16>
    %cst_27 = arith.constant dense<0.000000e+00> : vector<32x128xf32>
    %40 = tpu.matmul %10, %39, %cst_27 {dimension_numbers = #tpu.dot_dimension_numbers<[1], [0], [0], [1], [0, 0, 1, 1], [], []>} : vector<32x8xbf16>, vector<8x128xbf16>, vector<32x128xf32> -> vector<32x128xf32>
    %cst_28 = arith.constant dense<0.000000e+00> : vector<32xf32>
    %41 = vector.multi_reduction <add>, %40, %cst_28 [1] : vector<32x128xf32> to vector<32xf32>
    %42 = vector.shape_cast %41 : vector<32xf32> to vector<32x1xf32>
    %cst_29 = arith.constant 3.125000e-02 : f32
    %43 = vector.broadcast %cst_29 : f32 to vector<32x1xf32>
    %44 = arith.mulf %42, %43 : vector<32x1xf32>
    %45 = vector.broadcast %44 : vector<32x1xf32> to vector<32x128xf32>
    %46 = arith.subf %40, %45 : vector<32x128xf32>
    %47 = vector.broadcast %0 : vector<1x128xf32> to vector<32x128xf32>
    %48 = arith.mulf %46, %47 : vector<32x128xf32>
    %49 = arith.mulf %48, %48 : vector<32x128xf32>
    %cst_30 = arith.constant dense<0.000000e+00> : vector<32xf32>
    %50 = vector.multi_reduction <add>, %49, %cst_30 [1] : vector<32x128xf32> to vector<32xf32>
    %51 = vector.shape_cast %50 : vector<32xf32> to vector<32x1xf32>
    %cst_31 = arith.constant 3.125000e-02 : f32
    %52 = vector.broadcast %cst_31 : f32 to vector<32x1xf32>
    %53 = arith.mulf %51, %52 : vector<32x1xf32>
    %cst_32 = arith.constant 9.99999974E-6 : f32
    %54 = vector.broadcast %cst_32 : f32 to vector<32x1xf32>
    %55 = arith.addf %53, %54 : vector<32x1xf32>
    %56 = math.rsqrt %55 : vector<32x1xf32>
    %57 = vector.broadcast %56 : vector<32x1xf32> to vector<32x128xf32>
    %58 = arith.mulf %46, %57 : vector<32x128xf32>
    %59 = vector.broadcast %8 : vector<32x1xf32> to vector<32x128xf32>
    %60 = arith.mulf %58, %59 : vector<32x128xf32>
    %61 = vector.broadcast %9 : vector<32x1xf32> to vector<32x128xf32>
    %62 = arith.addf %60, %61 : vector<32x128xf32>
    %cst_33 = arith.constant 0.000000e+00 : f32
    %63 = vector.broadcast %cst_33 : f32 to vector<32x128xf32>
    %64 = arith.maximumf %62, %63 : vector<32x128xf32>
    %65 = vector.broadcast %0 : vector<1x128xf32> to vector<32x128xf32>
    %66 = arith.mulf %64, %65 : vector<32x128xf32>
    %c2_i32 = arith.constant 2 : i32
    %67 = tpu.dynamic_rotate %66 by %c2_i32 dim 1 : vector<32x128xf32>, i32 -> vector<32x128xf32>
    %68 = vector.broadcast %1 : vector<1x128xf32> to vector<32x128xf32>
    %69 = arith.mulf %67, %68 : vector<32x128xf32>
    %70 = arith.truncf %69 : vector<32x128xf32> to vector<32x128xbf16>
    %71 = vector.broadcast %2 : vector<1x128xf32> to vector<32x128xf32>
    %72 = arith.mulf %66, %71 : vector<32x128xf32>
    %73 = arith.truncf %72 : vector<32x128xf32> to vector<32x128xbf16>
    %c126_i32 = arith.constant 126 : i32
    %74 = tpu.dynamic_rotate %66 by %c126_i32 dim 1 : vector<32x128xf32>, i32 -> vector<32x128xf32>
    %75 = vector.broadcast %3 : vector<1x128xf32> to vector<32x128xf32>
    %76 = arith.mulf %74, %75 : vector<32x128xf32>
    %77 = arith.truncf %76 : vector<32x128xf32> to vector<32x128xbf16>
    %78 = tpu.concatenate %70, %73, %77 in 0 : vector<32x128xbf16>, vector<32x128xbf16>, vector<32x128xbf16> -> vector<96x128xbf16>
    %cst_34 = arith.constant dense<0.000000e+00> : vector<8x128xf32>
    %79 = tpu.matmul %11, %78, %cst_34 {dimension_numbers = #tpu.dot_dimension_numbers<[1], [0], [0], [1], [0, 0, 1, 1], [], []>} : vector<8x96xbf16>, vector<96x128xbf16>, vector<8x128xf32> -> vector<8x128xf32>
    %c8 = arith.constant 8 : index
    %c0_35 = arith.constant 0 : index
    %80 = vector.load %arg5[%c8, %c0_35] : memref<24x128xf32, #tpu.memory_space<vmem>>, vector<8x128xf32>
    tpu.vector_store %arg5[%c8, %c0_35], %79 {strides = array<i32>} : memref<24x128xf32, #tpu.memory_space<vmem>>, vector<8x128xf32>,
    %c0_36 = arith.constant 0 : index
    %c4 = arith.constant 4 : index
    %81 = vector.load %arg2[%c0_36, %c4] : memref<32x8xf32, #tpu.memory_space<vmem>>, vector<16x1xf32>
    %c0_37 = arith.constant 0 : index
    %c5 = arith.constant 5 : index
    %82 = vector.load %arg2[%c0_37, %c5] : memref<32x8xf32, #tpu.memory_space<vmem>>, vector<16x1xf32>
    %c0_38 = arith.constant 0 : index
    %c6 = arith.constant 6 : index
    %83 = vector.load %arg2[%c0_38, %c6] : memref<32x8xf32, #tpu.memory_space<vmem>>, vector<32x1xf32>
    %c0_39 = arith.constant 0 : index
    %c7 = arith.constant 7 : index
    %84 = vector.load %arg2[%c0_39, %c7] : memref<32x8xf32, #tpu.memory_space<vmem>>, vector<32x1xf32>
    %c32 = arith.constant 32 : index
    %c0_40 = arith.constant 0 : index
    %85 = vector.load %arg3[%c32, %c0_40] : memref<64x16xbf16, #tpu.memory_space<vmem>>, vector<32x16xbf16>
    %c8_41 = arith.constant 8 : index
    %c0_42 = arith.constant 0 : index
    %86 = vector.load %arg4[%c8_41, %c0_42] : memref<16x96xbf16, #tpu.memory_space<vmem>>, vector<8x96xbf16>
    %c0_43 = arith.constant 0 : index
    %c0_44 = arith.constant 0 : index
    %87 = vector.load %arg5[%c0_43, %c0_44] : memref<24x128xf32, #tpu.memory_space<vmem>>, vector<16x128xf32>
    %cst_45 = arith.constant dense<0.000000e+00> : vector<16xf32>
    %88 = vector.multi_reduction <add>, %87, %cst_45 [1] : vector<16x128xf32> to vector<16xf32>
    %89 = vector.shape_cast %88 : vector<16xf32> to vector<16x1xf32>
    %cst_46 = arith.constant 3.125000e-02 : f32
    %90 = vector.broadcast %cst_46 : f32 to vector<16x1xf32>
    %91 = arith.mulf %89, %90 : vector<16x1xf32>
    %92 = vector.broadcast %91 : vector<16x1xf32> to vector<16x128xf32>
    %93 = arith.subf %87, %92 : vector<16x128xf32>
    %94 = vector.broadcast %0 : vector<1x128xf32> to vector<16x128xf32>
    %95 = arith.mulf %93, %94 : vector<16x128xf32>
    %96 = arith.mulf %95, %95 : vector<16x128xf32>
    %cst_47 = arith.constant dense<0.000000e+00> : vector<16xf32>
    %97 = vector.multi_reduction <add>, %96, %cst_47 [1] : vector<16x128xf32> to vector<16xf32>
    %98 = vector.shape_cast %97 : vector<16xf32> to vector<16x1xf32>
    %cst_48 = arith.constant 3.125000e-02 : f32
    %99 = vector.broadcast %cst_48 : f32 to vector<16x1xf32>
    %100 = arith.mulf %98, %99 : vector<16x1xf32>
    %cst_49 = arith.constant 9.99999974E-6 : f32
    %101 = vector.broadcast %cst_49 : f32 to vector<16x1xf32>
    %102 = arith.addf %100, %101 : vector<16x1xf32>
    %103 = math.rsqrt %102 : vector<16x1xf32>
    %104 = vector.broadcast %103 : vector<16x1xf32> to vector<16x128xf32>
    %105 = arith.mulf %93, %104 : vector<16x128xf32>
    %106 = vector.broadcast %81 : vector<16x1xf32> to vector<16x128xf32>
    %107 = arith.mulf %105, %106 : vector<16x128xf32>
    %108 = vector.broadcast %82 : vector<16x1xf32> to vector<16x128xf32>
    %109 = arith.addf %107, %108 : vector<16x128xf32>
    %cst_50 = arith.constant 0.000000e+00 : f32
    %110 = vector.broadcast %cst_50 : f32 to vector<16x128xf32>
    %111 = arith.maximumf %109, %110 : vector<16x128xf32>
    %112 = vector.broadcast %0 : vector<1x128xf32> to vector<16x128xf32>
    %113 = arith.mulf %111, %112 : vector<16x128xf32>
    %114 = arith.truncf %113 : vector<16x128xf32> to vector<16x128xbf16>
    %cst_51 = arith.constant dense<0.000000e+00> : vector<32x128xf32>
    %115 = tpu.matmul %85, %114, %cst_51 {dimension_numbers = #tpu.dot_dimension_numbers<[1], [0], [0], [1], [0, 0, 1, 1], [], []>} : vector<32x16xbf16>, vector<16x128xbf16>, vector<32x128xf32> -> vector<32x128xf32>
    %cst_52 = arith.constant dense<0.000000e+00> : vector<32xf32>
    %116 = vector.multi_reduction <add>, %115, %cst_52 [1] : vector<32x128xf32> to vector<32xf32>
    %117 = vector.shape_cast %116 : vector<32xf32> to vector<32x1xf32>
    %cst_53 = arith.constant 3.125000e-02 : f32
    %118 = vector.broadcast %cst_53 : f32 to vector<32x1xf32>
    %119 = arith.mulf %117, %118 : vector<32x1xf32>
    %120 = vector.broadcast %119 : vector<32x1xf32> to vector<32x128xf32>
    %121 = arith.subf %115, %120 : vector<32x128xf32>
    %122 = vector.broadcast %0 : vector<1x128xf32> to vector<32x128xf32>
    %123 = arith.mulf %121, %122 : vector<32x128xf32>
    %124 = arith.mulf %123, %123 : vector<32x128xf32>
    %cst_54 = arith.constant dense<0.000000e+00> : vector<32xf32>
    %125 = vector.multi_reduction <add>, %124, %cst_54 [1] : vector<32x128xf32> to vector<32xf32>
    %126 = vector.shape_cast %125 : vector<32xf32> to vector<32x1xf32>
    %cst_55 = arith.constant 3.125000e-02 : f32
    %127 = vector.broadcast %cst_55 : f32 to vector<32x1xf32>
    %128 = arith.mulf %126, %127 : vector<32x1xf32>
    %cst_56 = arith.constant 9.99999974E-6 : f32
    %129 = vector.broadcast %cst_56 : f32 to vector<32x1xf32>
    %130 = arith.addf %128, %129 : vector<32x1xf32>
    %131 = math.rsqrt %130 : vector<32x1xf32>
    %132 = vector.broadcast %131 : vector<32x1xf32> to vector<32x128xf32>
    %133 = arith.mulf %121, %132 : vector<32x128xf32>
    %134 = vector.broadcast %83 : vector<32x1xf32> to vector<32x128xf32>
    %135 = arith.mulf %133, %134 : vector<32x128xf32>
    %136 = vector.broadcast %84 : vector<32x1xf32> to vector<32x128xf32>
    %137 = arith.addf %135, %136 : vector<32x128xf32>
    %cst_57 = arith.constant 0.000000e+00 : f32
    %138 = vector.broadcast %cst_57 : f32 to vector<32x128xf32>
    %139 = arith.maximumf %137, %138 : vector<32x128xf32>
    %140 = vector.broadcast %0 : vector<1x128xf32> to vector<32x128xf32>
    %141 = arith.mulf %139, %140 : vector<32x128xf32>
    %c2_i32_58 = arith.constant 2 : i32
    %142 = tpu.dynamic_rotate %141 by %c2_i32_58 dim 1 : vector<32x128xf32>, i32 -> vector<32x128xf32>
    %143 = vector.broadcast %1 : vector<1x128xf32> to vector<32x128xf32>
    %144 = arith.mulf %142, %143 : vector<32x128xf32>
    %145 = arith.truncf %144 : vector<32x128xf32> to vector<32x128xbf16>
    %146 = vector.broadcast %2 : vector<1x128xf32> to vector<32x128xf32>
    %147 = arith.mulf %141, %146 : vector<32x128xf32>
    %148 = arith.truncf %147 : vector<32x128xf32> to vector<32x128xbf16>
    %c126_i32_59 = arith.constant 126 : i32
    %149 = tpu.dynamic_rotate %141 by %c126_i32_59 dim 1 : vector<32x128xf32>, i32 -> vector<32x128xf32>
    %150 = vector.broadcast %3 : vector<1x128xf32> to vector<32x128xf32>
    %151 = arith.mulf %149, %150 : vector<32x128xf32>
    %152 = arith.truncf %151 : vector<32x128xf32> to vector<32x128xbf16>
    %153 = tpu.concatenate %145, %148, %152 in 0 : vector<32x128xbf16>, vector<32x128xbf16>, vector<32x128xbf16> -> vector<96x128xbf16>
    %cst_60 = arith.constant dense<0.000000e+00> : vector<8x128xf32>
    %154 = tpu.matmul %86, %153, %cst_60 {dimension_numbers = #tpu.dot_dimension_numbers<[1], [0], [0], [1], [0, 0, 1, 1], [], []>} : vector<8x96xbf16>, vector<96x128xbf16>, vector<8x128xf32> -> vector<8x128xf32>
    %c16 = arith.constant 16 : index
    %c0_61 = arith.constant 0 : index
    %155 = vector.load %arg5[%c16, %c0_61] : memref<24x128xf32, #tpu.memory_space<vmem>>, vector<8x128xf32>
    tpu.vector_store %arg5[%c16, %c0_61], %154 {strides = array<i32>} : memref<24x128xf32, #tpu.memory_space<vmem>>, vector<8x128xf32>,
    return
  }
}

</mosaic_0001>

<llo_original>
// kernel: tpu_custom_call.1
$region0: #{tpu_custom_call.1}
  #allocation0 [shape = 'u32[]', space=smem, size = 0x4, offset = 0x4, fixed_abs, tag = 'smem constant byte address 0x4 - core index']
  #allocation1 [shape = 'u32[144,128]{1,0:T(1,128)}', space=vmem, size = 0x12000, scoped, tag = 'internal scratch']
  %s0 = inlined_call_operand.vmem [shape: f32[8,128], index: 0, kind: input, shape index: {}]
  %s1 = inlined_call_operand.vmem [shape: f32[4,128], index: 1, kind: input, shape index: {}]
  %s2 = inlined_call_operand.vmem [shape: f32[32,8], index: 2, kind: input, shape index: {}]
  %s3 = inlined_call_operand.vmem [shape: bf16[64,16], index: 3, kind: input, shape index: {}]
  %s4 = inlined_call_operand.vmem [shape: bf16[16,96], index: 4, kind: input, shape index: {}]
  %s5 = inlined_call_operand.hbm [shape: f32[24,128], index: 5, kind: output, shape index: {}]
  %s6 = sld [smem:[#allocation0]]
  $region30: #{tpu_custom_call.1} parent=0
    _
  %s8 = ssub.s32 1, %s6
  %s9 = scalar_select 0, %s8, %s6
  $region1: #{tpu_custom_call.1} parent=0
    #allocation2 [shape = 'u8[12288]{0}', space=vmem, size = 0x3000, scoped, tag = 'output window, operand 0, single buffered']
    #allocation3 [shape = 's32[1]{0}', space=sflag, size = 0x4, scoped, tag = 'scoped memory for tpu_custom_call.1']
    %10 = vsyncpa [#allocation3], 0
    // Predicated region
    $region2: #{tpu_custom_call.1} parent=1 // pred_check
      _
    $region3: #{tpu_custom_call.1} parent=1 // pred_check_branch
      %12 = sbr.rel (0) target = $region5
    $region4: #{tpu_custom_call.1} parent=1 // pred_region
      _
    $region5: #{tpu_custom_call.1} parent=1 // pred_fallthru
      _
    // Predicated region
    $region6: #{tpu_custom_call.1} parent=1 // pred_check
      _
    $region7: #{tpu_custom_call.1} parent=1 // pred_check_branch
      %14 = sbr.rel (0) target = $region9
    $region8: #{tpu_custom_call.1} parent=1 // pred_region
      _
    $region9: #{tpu_custom_call.1} parent=1 // pred_fallthru
      _
    // Predicated region
    $region10: #{tpu_custom_call.1} parent=1 // pred_check
      _
    $region11: #{tpu_custom_call.1} parent=1 // pred_check_branch
      %16 = sbr.rel (0) target = $region13
    $region12: #{tpu_custom_call.1} parent=1 // pred_region
      _
    $region13: #{tpu_custom_call.1} parent=1 // pred_fallthru
      _
    // Predicated region
    $region14: #{tpu_custom_call.1} parent=1 // pred_check
      _
    $region15: #{tpu_custom_call.1} parent=1 // pred_check_branch
      %18 = sbr.rel (0) target = $region17
    $region16: #{tpu_custom_call.1} parent=1 // pred_region
      _
    $region17: #{tpu_custom_call.1} parent=1 // pred_fallthru
      _
    // Predicated region
    $region18: #{tpu_custom_call.1} parent=1 // pred_check
      _
    $region19: #{tpu_custom_call.1} parent=1 // pred_check_branch
      %20 = sbr.rel (0) target = $region21
    $region20: #{tpu_custom_call.1} parent=1 // pred_region
      _
    $region21: #{tpu_custom_call.1} parent=1 // pred_fallthru
      _
    %v22 = vld [vmem:[%s1] sm:$0x1]
    %v23 = vld [vmem:[%s1 + $0x1] sm:$0x1]
    %v24 = vld [vmem:[%s1 + $0x2] sm:$0x1]
    %v25 = vld [vmem:[%s1 + $0x3] sm:$0x1]
    %v26 = vld [vmem:[%s0] sm:$0xff]
    %27 = vst [vmem:[#allocation2] sm:$0xff] %v26
    %v28 = vld [vmem:[%s2] sm:$0xff]
    %v29 = vld [vmem:[%s2 + $0x8] sm:$0xff]
    %v30 = vld [vmem:[%s2 + $0x10] sm:$0xff]
    %v31 = vld [vmem:[%s2 + $0x18] sm:$0xff]
    %v32 = vld [vmem:[%s3] sm:$0xf]
    %v33 = vld [vmem:[%s3 + $0x4] sm:$0xf]
    %v34 = vld [vmem:[%s3 + $0x8] sm:$0xf]
    %v35 = vld [vmem:[%s3 + $0xc] sm:$0xf]
    %v36 = vld [vmem:[%s4] sm:$0xf]
    %v37 = vld [vmem:[#allocation2] sm:$0xff]
    %38 = vadd.xlane.f32.xlu0 %v37
    %v39 = vpop.xlane.xlu0 %38
    %v40 = vmul.f32 %v39, 0.03125
    %v41 = vsub.f32 %v37, %v40
    %v42 = vlaneseq
    %v43 = vshrl.u32 %v42, 7
    %v44 = vsub.s32 0, %v43
    %v45 = vrot.slane %v22, %v44
    %v46 = vmul.f32 %v41, %v45
    %v47 = vmul.f32 %v46, %v46
    %48 = vadd.xlane.f32.xlu0 %v47
    %v49 = vpop.xlane.xlu0 %48
    %v50 = vmul.f32 %v49, 0.03125
    %v51 = vadd.f32 %v50, 1e-05
    %v52 = vrsqrt.pop %v51
    %v53 = vmul.f32 %v41, %v52
    %55 = vset.pattern.permute.xlu0 0
    %56 = vperm.xlu0 %55, %v28
    %v57 = vpop.permute.xlu0 %56
    %v59 = vmul.f32 %v53, %v57
    %60 = vset.pattern.permute.xlu0 1
    %61 = vperm.xlu0 %60, %v28
    %v62 = vpop.permute.xlu0 %61
    %v64 = vadd.f32 %v59, %v62
    %v65 = vmax.f32 %v64, 0.0
    %v66 = vmul.f32 %v65, %v45
    %v67 = vpack.c.bf16 %v66, %v66
    %v72 = vunpack.c.l.b16 %v32
    %v73 = vunpack.c.l.b16 %v33
    %v74 = vunpack.c.l.b16 %v34
    %v75 = vunpack.c.l.b16 %v35
    %v76 = vpack.c.b16 %v73, %v72
    %v77 = vpack.c.b16 %v75, %v74
    %vm78 = vcmask 64512
    %v80 = vsel %vm78, %v76, 0
    %v83 = vsel %vm78, %v77, 0
    %vm85 = vcmask 1043456
    %v87 = vsel %vm85, %v67, 0
    %89 = vmatprep.subr.bf16.mxu0 0
    %90 = vmatpush1.bf16.msra.mxu0 0
    %91 = vmatprep.subr.bf16.mxu0 0
    %92 = vmatpush1.bf16.msra.mxu0 0
    %93 = vmatprep.subr.bf16.mxu0 0
    %94 = vmatpush1.bf16.msra.mxu0 0
    %95 = vmatprep.subr.bf16.mxu0 0
    %96 = vmatpush1.bf16.msra.mxu0 0
    %97 = vmatprep.subr.bf16.mxu0 0
    %98 = vmatpush1.bf16.msra.mxu0 0
    %99 = vmatprep.subr.bf16.mxu0 0
    %100 = vmatpush1.bf16.msra.mxu0 0
    %101 = vmatprep.subr.bf16.mxu0 0
    %102 = vmatpush1.bf16.msra.mxu0 0
    %103 = vmatprep.subr.bf16.mxu0 0
    %104 = vmatpush1.bf16.msra.mxu0 %v87
    %105 = vmatprep.subr.bf16.mxu0 0
    %106 = vmatpush2.bf16.msra.mxu0 0
    %107 = vmatprep.subr.bf16.mxu0 0
    %108 = vmatpush2.bf16.msra.mxu0 0
    %109 = vmatprep.subr.bf16.mxu0 0
    %110 = vmatpush2.bf16.msra.mxu0 0
    %111 = vmatprep.subr.bf16.mxu0 0
    %112 = vmatpush2.bf16.msra.mxu0 0
    %113 = vmatprep.subr.bf16.mxu0 0
    %114 = vmatpush2.bf16.msra.mxu0 0
    %115 = vmatprep.subr.bf16.mxu0 0
    %116 = vmatpush2.bf16.msra.mxu0 0
    %117 = vmatprep.subr.bf16.mxu0 0
    %118 = vmatpush2.bf16.msra.mxu0 0
    %119 = vmatprep.subr.bf16.mxu0 0
    %120 = vmatpush2.bf16.msra.mxu0 0
    %121 = vmatprep.mubr.bf16.mxu0 0
    %122 = vmatmul.mubr.bf16.gmra.mxu0 %v80
    %v123 = vpop.f32.mrf.mxu0
    %v124 = vadd.f32 0.0, %v123
    %v125 = vpop.f32.mrf.mxu0
    %v126 = vpop.f32.mrf.mxu0
    %v127 = vadd.f32 0.0, %v126
    %v128 = vpop.f32.mrf.mxu0
    %129 = vmatprep.mubr.bf16.mxu0 0
    %130 = vmatmul.mubr.bf16.gmra.mxu0 %v83
    %v131 = vpop.f32.mrf.mxu0
    %v132 = vadd.f32 0.0, %v131
    %v133 = vpop.f32.mrf.mxu0
    %v134 = vpop.f32.mrf.mxu0
    %v135 = vadd.f32 0.0, %v134
    %v136 = vpop.f32.mrf.mxu0
    %137 = vdwg.mxu0
    %138 = vadd.xlane.f32.xlu0 %v124
    %v139 = vpop.xlane.xlu0 %138
    %140 = vadd.xlane.f32.xlu0 %v127
    %v141 = vpop.xlane.xlu0 %140
    %142 = vadd.xlane.f32.xlu0 %v132
    %v143 = vpop.xlane.xlu0 %142
    %144 = vadd.xlane.f32.xlu0 %v135
    %v145 = vpop.xlane.xlu0 %144
    %v146 = vmul.f32 %v139, 0.03125
    %v147 = vmul.f32 %v141, 0.03125
    %v148 = vmul.f32 %v143, 0.03125
    %v149 = vmul.f32 %v145, 0.03125
    %v150 = vsub.f32 %v124, %v146
    %v151 = vsub.f32 %v127, %v147
    %v152 = vsub.f32 %v132, %v148
    %v153 = vsub.f32 %v135, %v149
    %v154 = vmul.f32 %v150, %v45
    %v155 = vmul.f32 %v151, %v45
    %v156 = vmul.f32 %v152, %v45
    %v157 = vmul.f32 %v153, %v45
    %v158 = vmul.f32 %v154, %v154
    %v159 = vmul.f32 %v155, %v155
    %v160 = vmul.f32 %v156, %v156
    %v161 = vmul.f32 %v157, %v157
    %162 = vadd.xlane.f32.xlu0 %v158
    %v163 = vpop.xlane.xlu0 %162
    %164 = vadd.xlane.f32.xlu0 %v159
    %v165 = vpop.xlane.xlu0 %164
    %166 = vadd.xlane.f32.xlu0 %v160
    %v167 = vpop.xlane.xlu0 %166
    %168 = vadd.xlane.f32.xlu0 %v161
    %v169 = vpop.xlane.xlu0 %168
    %v170 = vmul.f32 %v163, 0.03125
    %v171 = vmul.f32 %v165, 0.03125
    %v172 = vmul.f32 %v167, 0.03125
    %v173 = vmul.f32 %v169, 0.03125
    %v174 = vadd.f32 %v170, 1e-05
    %v175 = vadd.f32 %v171, 1e-05
    %v176 = vadd.f32 %v172, 1e-05
    %v177 = vadd.f32 %v173, 1e-05
    %v178 = vrsqrt.pop %v174
    %v179 = vrsqrt.pop %v175
    %v180 = vrsqrt.pop %v176
    %v181 = vrsqrt.pop %v177
    %v182 = vmul.f32 %v150, %v178
    %v183 = vmul.f32 %v151, %v179
    %v184 = vmul.f32 %v152, %v180
    %v185 = vmul.f32 %v153, %v181
    %186 = vset.pattern.permute.xlu0 2
    %187 = vperm.xlu0 %186, %v28
    %v188 = vpop.permute.xlu0 %187
    %191 = vset.pattern.permute.xlu0 2
    %192 = vperm.xlu0 %191, %v29
    %v193 = vpop.permute.xlu0 %192
    %196 = vset.pattern.permute.xlu0 2
    %197 = vperm.xlu0 %196, %v30
    %v198 = vpop.permute.xlu0 %197
    %201 = vset.pattern.permute.xlu0 2
    %202 = vperm.xlu0 %201, %v31
    %v203 = vpop.permute.xlu0 %202
    %v205 = vmul.f32 %v182, %v188
    %v206 = vmul.f32 %v183, %v193
    %v207 = vmul.f32 %v184, %v198
    %v208 = vmul.f32 %v185, %v203
    %209 = vset.pattern.permute.xlu0 3
    %210 = vperm.xlu0 %209, %v28
    %v211 = vpop.permute.xlu0 %210
    %213 = vset.pattern.permute.xlu0 3
    %214 = vperm.xlu0 %213, %v29
    %v215 = vpop.permute.xlu0 %214
    %217 = vset.pattern.permute.xlu0 3
    %218 = vperm.xlu0 %217, %v30
    %v219 = vpop.permute.xlu0 %218
    %221 = vset.pattern.permute.xlu0 3
    %222 = vperm.xlu0 %221, %v31
    %v223 = vpop.permute.xlu0 %222
    %v225 = vadd.f32 %v205, %v211
    %v226 = vadd.f32 %v206, %v215
    %v227 = vadd.f32 %v207, %v219
    %v228 = vadd.f32 %v208, %v223
    %v229 = vmax.f32 %v225, 0.0
    %v230 = vmax.f32 %v226, 0.0
    %v231 = vmax.f32 %v227, 0.0
    %v232 = vmax.f32 %v228, 0.0
    %v233 = vmul.f32 %v229, %v45
    %v234 = vmul.f32 %v230, %v45
    %v235 = vmul.f32 %v231, %v45
    %v236 = vmul.f32 %v232, %v45
    %237 = vrot.lane.b32.xlu0 %v233, 2
    %v238 = vpop.permute.xlu0 %237
    %239 = vrot.lane.b32.xlu0 %v234, 2
    %v240 = vpop.permute.xlu0 %239
    %241 = vrot.lane.b32.xlu0 %v235, 2
    %v242 = vpop.permute.xlu0 %241
    %243 = vrot.lane.b32.xlu0 %v236, 2
    %v244 = vpop.permute.xlu0 %243
    %v245 = vlaneseq
    %v246 = vshrl.u32 %v245, 7
    %v247 = vsub.s32 0, %v246
    %v248 = vrot.slane %v23, %v247
    %v249 = vmul.f32 %v238, %v248
    %v250 = vmul.f32 %v240, %v248
    %v251 = vmul.f32 %v242, %v248
    %v252 = vmul.f32 %v244, %v248
    %v253 = vpack.c.bf16 %v250, %v249
    %v254 = vpack.c.bf16 %v252, %v251
    %v255 = vlaneseq
    %v256 = vshrl.u32 %v255, 7
    %v257 = vsub.s32 0, %v256
    %v258 = vrot.slane %v24, %v257
    %v259 = vmul.f32 %v233, %v258
    %v260 = vmul.f32 %v234, %v258
    %v261 = vmul.f32 %v235, %v258
    %v262 = vmul.f32 %v236, %v258
    %v263 = vpack.c.bf16 %v260, %v259
    %v264 = vpack.c.bf16 %v262, %v261
    %265 = vrot.lane.b32.xlu0 %v233, 126
    %v266 = vpop.permute.xlu0 %265
    %267 = vrot.lane.b32.xlu0 %v234, 126
    %v268 = vpop.permute.xlu0 %267
    %269 = vrot.lane.b32.xlu0 %v235, 126
    %v270 = vpop.permute.xlu0 %269
    %271 = vrot.lane.b32.xlu0 %v236, 126
    %v272 = vpop.permute.xlu0 %271
    %v273 = vlaneseq
    %v274 = vshrl.u32 %v273, 7
    %v275 = vsub.s32 0, %v274
    %v276 = vrot.slane %v25, %v275
    %v277 = vmul.f32 %v266, %v276
    %v278 = vmul.f32 %v268, %v276
    %v279 = vmul.f32 %v270, %v276
    %v280 = vmul.f32 %v272, %v276
    %v281 = vpack.c.bf16 %v278, %v277
    %v282 = vpack.c.bf16 %v280, %v279
    %vm283 = vcmask 785408
    %v285 = vsel %vm283, %v36, 0
    %287 = vmatprep.subr.bf16.mxu0 0
    %288 = vmatpush1.bf16.msra.mxu0 0
    %289 = vmatprep.subr.bf16.mxu0 0
    %290 = vmatpush1.bf16.msra.mxu0 0
    %291 = vmatprep.subr.bf16.mxu0 0
    %292 = vmatpush1.bf16.msra.mxu0 %v282
    %293 = vmatprep.subr.bf16.mxu0 0
    %294 = vmatpush1.bf16.msra.mxu0 %v281
    %295 = vmatprep.subr.bf16.mxu0 0
    %296 = vmatpush1.bf16.msra.mxu0 %v264
    %297 = vmatprep.subr.bf16.mxu0 0
    %298 = vmatpush1.bf16.msra.mxu0 %v263
    %299 = vmatprep.subr.bf16.mxu0 0
    %300 = vmatpush1.bf16.msra.mxu0 %v254
    %301 = vmatprep.subr.bf16.mxu0 0
    %302 = vmatpush1.bf16.msra.mxu0 %v253
    %303 = vmatprep.subr.bf16.mxu0 0
    %304 = vmatpush2.bf16.msra.mxu0 0
    %305 = vmatprep.subr.bf16.mxu0 0
    %306 = vmatpush2.bf16.msra.mxu0 0
    %307 = vmatprep.subr.bf16.mxu0 0
    %308 = vmatpush2.bf16.msra.mxu0 0
    %309 = vmatprep.subr.bf16.mxu0 0
    %310 = vmatpush2.bf16.msra.mxu0 0
    %311 = vmatprep.subr.bf16.mxu0 0
    %312 = vmatpush2.bf16.msra.mxu0 0
    %313 = vmatprep.subr.bf16.mxu0 0
    %314 = vmatpush2.bf16.msra.mxu0 0
    %315 = vmatprep.subr.bf16.mxu0 0
    %316 = vmatpush2.bf16.msra.mxu0 0
    %317 = vmatprep.subr.bf16.mxu0 0
    %318 = vmatpush2.bf16.msra.mxu0 0
    %319 = vmatprep.mubr.bf16.mxu0 0
    %320 = vmatmul.mubr.bf16.gmra.mxu0 %v285
    %v321 = vpop.f32.mrf.mxu0
    %v322 = vadd.f32 0.0, %v321
    %v323 = vpop.f32.mrf.mxu0
    %v324 = vpop.f32.mrf.mxu0
    %v325 = vpop.f32.mrf.mxu0
    %326 = vdwg.mxu0
    %327 = vst [vmem:[#allocation2 + $0x8] sm:$0xff] %v322
    %v328 = vld [vmem:[%s2] sm:$0xff]
    %v329 = vld [vmem:[%s2 + $0x8] sm:$0xff]
    %v330 = vld [vmem:[%s2 + $0x10] sm:$0xff]
    %v331 = vld [vmem:[%s2 + $0x18] sm:$0xff]
    %v332 = vld [vmem:[%s3 + $0x10] sm:$0xf]
    %v333 = vld [vmem:[%s3 + $0x14] sm:$0xf]
    %v334 = vld [vmem:[%s3 + $0x18] sm:$0xf]
    %v335 = vld [vmem:[%s3 + $0x1c] sm:$0xf]
    %v336 = vld [vmem:[%s4 + $0x4] sm:$0xf]
    %v337 = vld [vmem:[#allocation2] sm:$0xff]
    %v338 = vld [vmem:[#allocation2 + $0x8] sm:$0xff]
    %339 = vadd.xlane.f32.xlu0 %v337
    %v340 = vpop.xlane.xlu0 %339
    %341 = vadd.xlane.f32.xlu0 %v338
    %v342 = vpop.xlane.xlu0 %341
    %v343 = vmul.f32 %v340, 0.03125
    %v344 = vmul.f32 %v342, 0.03125
    %v345 = vsub.f32 %v337, %v343
    %v346 = vsub.f32 %v338, %v344
    %v347 = vmul.f32 %v345, %v45
    %v348 = vmul.f32 %v346, %v45
    %v349 = vmul.f32 %v347, %v347
    %v350 = vmul.f32 %v348, %v348
    %351 = vadd.xlane.f32.xlu0 %v349
    %v352 = vpop.xlane.xlu0 %351
    %353 = vadd.xlane.f32.xlu0 %v350
    %v354 = vpop.xlane.xlu0 %353
    %v355 = vmul.f32 %v352, 0.03125
    %v356 = vmul.f32 %v354, 0.03125
    %v357 = vadd.f32 %v355, 1e-05
    %v358 = vadd.f32 %v356, 1e-05
    %v359 = vrsqrt.pop %v357
    %v360 = vrsqrt.pop %v358
    %v361 = vmul.f32 %v345, %v359
    %v362 = vmul.f32 %v346, %v360
    %364 = vset.pattern.permute.xlu0 4
    %365 = vperm.xlu0 %364, %v328
    %v366 = vpop.permute.xlu0 %365
    %369 = vset.pattern.permute.xlu0 4
    %370 = vperm.xlu0 %369, %v329
    %v371 = vpop.permute.xlu0 %370
    %v373 = vmul.f32 %v361, %v366
    %v374 = vmul.f32 %v362, %v371
    %375 = vset.pattern.permute.xlu0 5
    %376 = vperm.xlu0 %375, %v328
    %v377 = vpop.permute.xlu0 %376
    %379 = vset.pattern.permute.xlu0 5
    %380 = vperm.xlu0 %379, %v329
    %v381 = vpop.permute.xlu0 %380
    %v383 = vadd.f32 %v373, %v377
    %v384 = vadd.f32 %v374, %v381
    %v385 = vmax.f32 %v383, 0.0
    %v386 = vmax.f32 %v384, 0.0
    %v387 = vmul.f32 %v385, %v45
    %v388 = vmul.f32 %v386, %v45
    %v389 = vpack.c.bf16 %v388, %v387
    %v394 = vunpack.c.l.b16 %v332
    %v395 = vunpack.c.l.b16 %v333
    %v396 = vunpack.c.l.b16 %v334
    %v397 = vunpack.c.l.b16 %v335
    %v398 = vpack.c.b16 %v395, %v394
    %v399 = vpack.c.b16 %v397, %v396
    %vm400 = vcmask 130048
    %v402 = vsel %vm400, %v398, 0
    %v405 = vsel %vm400, %v399, 0
    %407 = vmatprep.subr.bf16.mxu0 0
    %408 = vmatpush1.bf16.msra.mxu0 0
    %409 = vmatprep.subr.bf16.mxu0 0
    %410 = vmatpush1.bf16.msra.mxu0 0
    %411 = vmatprep.subr.bf16.mxu0 0
    %412 = vmatpush1.bf16.msra.mxu0 0
    %413 = vmatprep.subr.bf16.mxu0 0
    %414 = vmatpush1.bf16.msra.mxu0 0
    %415 = vmatprep.subr.bf16.mxu0 0
    %416 = vmatpush1.bf16.msra.mxu0 0
    %417 = vmatprep.subr.bf16.mxu0 0
    %418 = vmatpush1.bf16.msra.mxu0 0
    %419 = vmatprep.subr.bf16.mxu0 0
    %420 = vmatpush1.bf16.msra.mxu0 0
    %421 = vmatprep.subr.bf16.mxu0 0
    %422 = vmatpush1.bf16.msra.mxu0 %v389
    %423 = vmatprep.subr.bf16.mxu0 0
    %424 = vmatpush2.bf16.msra.mxu0 0
    %425 = vmatprep.subr.bf16.mxu0 0
    %426 = vmatpush2.bf16.msra.mxu0 0
    %427 = vmatprep.subr.bf16.mxu0 0
    %428 = vmatpush2.bf16.msra.mxu0 0
    %429 = vmatprep.subr.bf16.mxu0 0
    %430 = vmatpush2.bf16.msra.mxu0 0
    %431 = vmatprep.subr.bf16.mxu0 0
    %432 = vmatpush2.bf16.msra.mxu0 0
    %433 = vmatprep.subr.bf16.mxu0 0
    %434 = vmatpush2.bf16.msra.mxu0 0
    %435 = vmatprep.subr.bf16.mxu0 0
    %436 = vmatpush2.bf16.msra.mxu0 0
    %437 = vmatprep.subr.bf16.mxu0 0
    %438 = vmatpush2.bf16.msra.mxu0 0
    %439 = vmatprep.mubr.bf16.mxu0 0
    %440 = vmatmul.mubr.bf16.gmra.mxu0 %v402
    %v441 = vpop.f32.mrf.mxu0
    %v442 = vadd.f32 0.0, %v441
    %v443 = vpop.f32.mrf.mxu0
    %v444 = vpop.f32.mrf.mxu0
    %v445 = vadd.f32 0.0, %v444
    %v446 = vpop.f32.mrf.mxu0
    %447 = vmatprep.mubr.bf16.mxu0 0
    %448 = vmatmul.mubr.bf16.gmra.mxu0 %v405
    %v449 = vpop.f32.mrf.mxu0
    %v450 = vadd.f32 0.0, %v449
    %v451 = vpop.f32.mrf.mxu0
    %v452 = vpop.f32.mrf.mxu0
    %v453 = vadd.f32 0.0, %v452
    %v454 = vpop.f32.mrf.mxu0
    %455 = vdwg.mxu0
    %456 = vadd.xlane.f32.xlu0 %v442
    %v457 = vpop.xlane.xlu0 %456
    %458 = vadd.xlane.f32.xlu0 %v445
    %v459 = vpop.xlane.xlu0 %458
    %460 = vadd.xlane.f32.xlu0 %v450
    %v461 = vpop.xlane.xlu0 %460
    %462 = vadd.xlane.f32.xlu0 %v453
    %v463 = vpop.xlane.xlu0 %462
    %v464 = vmul.f32 %v457, 0.03125
    %v465 = vmul.f32 %v459, 0.03125
    %v466 = vmul.f32 %v461, 0.03125
    %v467 = vmul.f32 %v463, 0.03125
    %v468 = vsub.f32 %v442, %v464
    %v469 = vsub.f32 %v445, %v465
    %v470 = vsub.f32 %v450, %v466
    %v471 = vsub.f32 %v453, %v467
    %v472 = vmul.f32 %v468, %v45
    %v473 = vmul.f32 %v469, %v45
    %v474 = vmul.f32 %v470, %v45
    %v475 = vmul.f32 %v471, %v45
    %v476 = vmul.f32 %v472, %v472
    %v477 = vmul.f32 %v473, %v473
    %v478 = vmul.f32 %v474, %v474
    %v479 = vmul.f32 %v475, %v475
    %480 = vadd.xlane.f32.xlu0 %v476
    %v481 = vpop.xlane.xlu0 %480
    %482 = vadd.xlane.f32.xlu0 %v477
    %v483 = vpop.xlane.xlu0 %482
    %484 = vadd.xlane.f32.xlu0 %v478
    %v485 = vpop.xlane.xlu0 %484
    %486 = vadd.xlane.f32.xlu0 %v479
    %v487 = vpop.xlane.xlu0 %486
    %v488 = vmul.f32 %v481, 0.03125
    %v489 = vmul.f32 %v483, 0.03125
    %v490 = vmul.f32 %v485, 0.03125
    %v491 = vmul.f32 %v487, 0.03125
    %v492 = vadd.f32 %v488, 1e-05
    %v493 = vadd.f32 %v489, 1e-05
    %v494 = vadd.f32 %v490, 1e-05
    %v495 = vadd.f32 %v491, 1e-05
    %v496 = vrsqrt.pop %v492
    %v497 = vrsqrt.pop %v493
    %v498 = vrsqrt.pop %v494
    %v499 = vrsqrt.pop %v495
    %v500 = vmul.f32 %v468, %v496
    %v501 = vmul.f32 %v469, %v497
    %v502 = vmul.f32 %v470, %v498
    %v503 = vmul.f32 %v471, %v499
    %504 = vset.pattern.permute.xlu0 6
    %505 = vperm.xlu0 %504, %v328
    %v506 = vpop.permute.xlu0 %505
    %508 = vset.pattern.permute.xlu0 6
    %509 = vperm.xlu0 %508, %v329
    %v510 = vpop.permute.xlu0 %509
    %513 = vset.pattern.permute.xlu0 6
    %514 = vperm.xlu0 %513, %v330
    %v515 = vpop.permute.xlu0 %514
    %518 = vset.pattern.permute.xlu0 6
    %519 = vperm.xlu0 %518, %v331
    %v520 = vpop.permute.xlu0 %519
    %v522 = vmul.f32 %v500, %v506
    %v523 = vmul.f32 %v501, %v510
    %v524 = vmul.f32 %v502, %v515
    %v525 = vmul.f32 %v503, %v520
    %526 = vset.pattern.permute.xlu0 7
    %527 = vperm.xlu0 %526, %v328
    %v528 = vpop.permute.xlu0 %527
    %530 = vset.pattern.permute.xlu0 7
    %531 = vperm.xlu0 %530, %v329
    %v532 = vpop.permute.xlu0 %531
    %534 = vset.pattern.permute.xlu0 7
    %535 = vperm.xlu0 %534, %v330
    %v536 = vpop.permute.xlu0 %535
    %538 = vset.pattern.permute.xlu0 7
    %539 = vperm.xlu0 %538, %v331
    %v540 = vpop.permute.xlu0 %539
    %v542 = vadd.f32 %v522, %v528
    %v543 = vadd.f32 %v523, %v532
    %v544 = vadd.f32 %v524, %v536
    %v545 = vadd.f32 %v525, %v540
    %v546 = vmax.f32 %v542, 0.0
    %v547 = vmax.f32 %v543, 0.0
    %v548 = vmax.f32 %v544, 0.0
    %v549 = vmax.f32 %v545, 0.0
    %v550 = vmul.f32 %v546, %v45
    %v551 = vmul.f32 %v547, %v45
    %v552 = vmul.f32 %v548, %v45
    %v553 = vmul.f32 %v549, %v45
    %554 = vrot.lane.b32.xlu0 %v550, 2
    %v555 = vpop.permute.xlu0 %554
    %556 = vrot.lane.b32.xlu0 %v551, 2
    %v557 = vpop.permute.xlu0 %556
    %558 = vrot.lane.b32.xlu0 %v552, 2
    %v559 = vpop.permute.xlu0 %558
    %560 = vrot.lane.b32.xlu0 %v553, 2
    %v561 = vpop.permute.xlu0 %560
    %v562 = vmul.f32 %v555, %v248
    %v563 = vmul.f32 %v557, %v248
    %v564 = vmul.f32 %v559, %v248
    %v565 = vmul.f32 %v561, %v248
    %v566 = vpack.c.bf16 %v563, %v562
    %v567 = vpack.c.bf16 %v565, %v564
    %v568 = vmul.f32 %v550, %v258
    %v569 = vmul.f32 %v551, %v258
    %v570 = vmul.f32 %v552, %v258
    %v571 = vmul.f32 %v553, %v258
    %v572 = vpack.c.bf16 %v569, %v568
    %v573 = vpack.c.bf16 %v571, %v570
    %574 = vrot.lane.b32.xlu0 %v550, 126
    %v575 = vpop.permute.xlu0 %574
    %576 = vrot.lane.b32.xlu0 %v551, 126
    %v577 = vpop.permute.xlu0 %576
    %578 = vrot.lane.b32.xlu0 %v552, 126
    %v579 = vpop.permute.xlu0 %578
    %580 = vrot.lane.b32.xlu0 %v553, 126
    %v581 = vpop.permute.xlu0 %580
    %v582 = vmul.f32 %v575, %v276
    %v583 = vmul.f32 %v577, %v276
    %v584 = vmul.f32 %v579, %v276
    %v585 = vmul.f32 %v581, %v276
    %v586 = vpack.c.bf16 %v583, %v582
    %v587 = vpack.c.bf16 %v585, %v584
    %v589 = vsel %vm283, %v336, 0
    %591 = vmatprep.subr.bf16.mxu0 0
    %592 = vmatpush1.bf16.msra.mxu0 0
    %593 = vmatprep.subr.bf16.mxu0 0
    %594 = vmatpush1.bf16.msra.mxu0 0
    %595 = vmatprep.subr.bf16.mxu0 0
    %596 = vmatpush1.bf16.msra.mxu0 %v587
    %597 = vmatprep.subr.bf16.mxu0 0
    %598 = vmatpush1.bf16.msra.mxu0 %v586
    %599 = vmatprep.subr.bf16.mxu0 0
    %600 = vmatpush1.bf16.msra.mxu0 %v573
    %601 = vmatprep.subr.bf16.mxu0 0
    %602 = vmatpush1.bf16.msra.mxu0 %v572
    %603 = vmatprep.subr.bf16.mxu0 0
    %604 = vmatpush1.bf16.msra.mxu0 %v567
    %605 = vmatprep.subr.bf16.mxu0 0
    %606 = vmatpush1.bf16.msra.mxu0 %v566
    %607 = vmatprep.subr.bf16.mxu0 0
    %608 = vmatpush2.bf16.msra.mxu0 0
    %609 = vmatprep.subr.bf16.mxu0 0
    %610 = vmatpush2.bf16.msra.mxu0 0
    %611 = vmatprep.subr.bf16.mxu0 0
    %612 = vmatpush2.bf16.msra.mxu0 0
    %613 = vmatprep.subr.bf16.mxu0 0
    %614 = vmatpush2.bf16.msra.mxu0 0
    %615 = vmatprep.subr.bf16.mxu0 0
    %616 = vmatpush2.bf16.msra.mxu0 0
    %617 = vmatprep.subr.bf16.mxu0 0
    %618 = vmatpush2.bf16.msra.mxu0 0
    %619 = vmatprep.subr.bf16.mxu0 0
    %620 = vmatpush2.bf16.msra.mxu0 0
    %621 = vmatprep.subr.bf16.mxu0 0
    %622 = vmatpush2.bf16.msra.mxu0 0
    %623 = vmatprep.mubr.bf16.mxu0 0
    %624 = vmatmul.mubr.bf16.gmra.mxu0 %v589
    %v625 = vpop.f32.mrf.mxu0
    %v626 = vadd.f32 0.0, %v625
    %v627 = vpop.f32.mrf.mxu0
    %v628 = vpop.f32.mrf.mxu0
    %v629 = vpop.f32.mrf.mxu0
    %630 = vdwg.mxu0
    %631 = vst [vmem:[#allocation2 + $0x10] sm:$0xff] %v626
    // Predicated region
    $region22: #{tpu_custom_call.1} parent=1 // pred_check
      _
    $region23: #{tpu_custom_call.1} parent=1 // pred_check_branch
      %633 = sbr.rel (0) target = $region25
    $region24: #{tpu_custom_call.1} parent=1 // pred_region
      %s635 = ssub.s32 384, 384
      %636 = vsyncadd [#allocation3], %s635
      %s637 = sshll.u32 [#allocation2], 4
      %s638 = int_to_ptr.vmem [resolvable:$true] %s637
      %643 = dma.vmem_to_hbm [thread:$0]  %s638, 384, %s5, [#allocation3], 128, 128, 8
    $region25: #{tpu_custom_call.1} parent=1 // pred_fallthru
      _
    // Predicated region
    $region26: #{tpu_custom_call.1} parent=1 // pred_check
      _
    $region27: #{tpu_custom_call.1} parent=1 // pred_check_branch
      %645 = sbr.rel (0) target = $region29
    $region28: #{tpu_custom_call.1} parent=1 // pred_region
      %646 = dma.done [#allocation3], 384
    $region29: #{tpu_custom_call.1} parent=1 // pred_fallthru
      _
    %647 = vsyncpa [#allocation3], 1

</llo_original>
